<compile_context>
chip_gen: v7x
topology: tpu7x:2x2x1
jax: 0.10.0
libtpu: 0.0.40
codegen_flags: <defaults>
</compile_context>

<pallas_src>
import jax
import jax.numpy as jnp
from jax import lax
from jax.experimental import pallas as pl
from jax.experimental.pallas import tpu as pltpu

BN_EPS = 1e-5


def projection_head_kernel(x_ref, w1_ref, gamma_ref, beta_ref, w2_ref, b2_ref, o_ref):
    # Block 1: Linear(in -> hidden). Bias omitted: BN centering cancels it.
    # Operands may be bf16 (v6e/v7x fast path); accumulate in f32 on the MXU.
    h = jnp.dot(x_ref[...], w1_ref[...], preferred_element_type=jnp.float32)

    # Block 1: BatchNorm1d(hidden), training-mode batch statistics, all in f32.
    mean = jnp.mean(h, axis=0, keepdims=True)
    centered = h - mean
    var = jnp.mean(centered * centered, axis=0, keepdims=True)   # biased variance
    # Fold gamma into the rsqrt scale: one (1, hidden) vector op, rsqrt on the EUP.
    scale = gamma_ref[...] * lax.rsqrt(var + BN_EPS)
    h = centered * scale + beta_ref[...]

    # Block 1: ReLU
    h = jnp.maximum(h, 0.0)

    # Block 2: Linear(hidden -> out_padded), no BN / non-linearity.
    # Cast activations to the weight dtype (bf16 path) just before the MXU.
    y = jnp.dot(h.astype(w2_ref.dtype), w2_ref[...],
                preferred_element_type=jnp.float32) + b2_ref[...]
    o_ref[...] = y.astype(o_ref.dtype)


def projection_head(x, w1, b1, gamma, beta, w2, b2, *, use_bf16_matmul=False):
    """x: (batch, in_features) -> (batch, out_features).

    b1 is accepted for API parity with nn.Linear but is NOT used: train-mode
    BatchNorm1d subtracts the batch mean, which cancels any constant bias
    added before it, so passing it to the kernel would be wasted DMA + VALU work.
    """
    del b1  # mathematically a no-op under train-mode BN

    batch, _ = x.shape
    hidden = w1.shape[1]
    out_features = w2.shape[1]
    out_dtype = x.dtype

    # Lane-dense output: pad out_features up to a multiple of 128 (zero columns in
    # w2 / zeros in b2) so the final store uses full-lane unmasked vst; slice the
    # pad off outside the kernel.
    out_pad = max(128, ((out_features + 127) // 128) * 128)
    if out_pad != out_features:
        w2p = jnp.zeros((hidden, out_pad), w2.dtype).at[:, :out_features].set(w2)
        b2p = jnp.zeros((1, out_pad), b2.dtype).at[:, :out_features].set(b2)
    else:
        w2p, b2p = w2, b2

    if use_bf16_matmul:
        # v6e/v7x: bf16-native MXU, ~2x matmul throughput, half the weight DMA.
        # BN math inside the kernel stays f32 (h comes out of the MXU as f32).
        x = x.astype(jnp.bfloat16)
        w1 = w1.astype(jnp.bfloat16)
        w2p = w2p.astype(jnp.bfloat16)

    vmem = pl.BlockSpec(memory_space=pltpu.MemorySpace.VMEM)
    out = pl.pallas_call(
        projection_head_kernel,
        out_shape=jax.ShapeDtypeStruct((batch, out_pad), out_dtype),
        in_specs=[vmem] * 6,
        out_specs=vmem,
    )(x, w1, gamma, beta, w2p, b2p)
    return out[:, :out_features]


def init_params(key, in_features, hidden_features, out_features):
    """Deterministic init mirroring nn.Linear (uniform +/- 1/sqrt(fan_in)) and
    nn.BatchNorm1d (gamma=1, beta=0). Weights stored as (in, out)."""
    k1, k2, k3, k4 = jax.random.split(key, 4)
    bound1 = 1.0 / (in_features ** 0.5)
    w1 = jax.random.uniform(k1, (in_features, hidden_features), jnp.float32,
                            -bound1, bound1)
    b1 = jax.random.uniform(k2, (1, hidden_features), jnp.float32, -bound1, bound1)
    gamma = jnp.ones((1, hidden_features), jnp.float32)
    beta = jnp.zeros((1, hidden_features), jnp.float32)
    bound2 = 1.0 / (hidden_features ** 0.5)
    w2 = jax.random.uniform(k3, (hidden_features, out_features), jnp.float32,
                            -bound2, bound2)
    b2 = jax.random.uniform(k4, (1, out_features), jnp.float32, -bound2, bound2)
    return w1, b1, gamma, beta, w2, b2


def _reference(x, w1, b1, gamma, beta, w2, b2):
    # Faithful PyTorch semantics (b1 included; BN centering cancels it anyway).
    h = x @ w1 + b1
    mean = jnp.mean(h, axis=0, keepdims=True)
    var = jnp.mean((h - mean) ** 2, axis=0, keepdims=True)
    h = (h - mean) / jnp.sqrt(var + BN_EPS) * gamma + beta
    h = jnp.maximum(h, 0.0)
    return h @ w2 + b2


if __name__ == "__main__":
    # ProjectionHead([(32, 32, nn.BatchNorm1d(32), nn.ReLU()), (32, 16, None, None)])
    batch, in_features, hidden_features, out_features = 8, 32, 32, 16

    key = jax.random.PRNGKey(0)
    kx, kp = jax.random.split(key)
    x = jax.random.normal(kx, (batch, in_features), jnp.float32)
    params = init_params(kp, in_features, hidden_features, out_features)
    ref = _reference(x, *params)

    # f32 MXU path (exact-ish): tight tolerance.
    out = jax.block_until_ready(projection_head(x, *params))
    assert out.shape == (batch, out_features)
    assert jnp.allclose(out, ref, atol=1e-4, rtol=1e-4), "f32 path mismatch vs reference"

    # bf16 MXU-operand path (v6e/v7x fast path): looser tolerance from bf16 rounding.
    out_bf16 = jax.block_until_ready(projection_head(x, *params, use_bf16_matmul=True))
    assert out_bf16.shape == (batch, out_features)
    assert jnp.allclose(out_bf16, ref, atol=5e-2, rtol=5e-2), "bf16 path mismatch vs reference"

    print("KERNEL_OK")
</pallas_src>

<mosaic_0001>
module attributes {stable_mosaic.version = 11 : i64} {
  func.func @projection_head_kernel(%arg0: memref<8x32xf32, #tpu.memory_space<vmem>>, %arg1: memref<32x32xf32, #tpu.memory_space<vmem>>, %arg2: memref<1x32xf32, #tpu.memory_space<vmem>>, %arg3: memref<1x32xf32, #tpu.memory_space<vmem>>, %arg4: memref<32x128xf32, #tpu.memory_space<vmem>>, %arg5: memref<1x128xf32, #tpu.memory_space<vmem>>, %arg6: memref<8x128xf32, #tpu.memory_space<vmem>>) attributes {dimension_semantics = [], scalar_prefetch = 0 : i64, scratch_operands = 0 : i64, tpu.core_type = #tpu.core_type<tc>} {
    %c0 = arith.constant 0 : index
    %c0_0 = arith.constant 0 : index
    %0 = vector.load %arg0[%c0, %c0_0] : memref<8x32xf32, #tpu.memory_space<vmem>>, vector<8x32xf32>
    %c0_1 = arith.constant 0 : index
    %c0_2 = arith.constant 0 : index
    %1 = vector.load %arg1[%c0_1, %c0_2] : memref<32x32xf32, #tpu.memory_space<vmem>>, vector<32x32xf32>
    %cst = arith.constant dense<0.000000e+00> : vector<8x32xf32>
    %2 = tpu.matmul %0, %1, %cst {dimension_numbers = #tpu.dot_dimension_numbers<[1], [0], [0], [1], [0, 0, 1, 1], [], []>} : vector<8x32xf32>, vector<32x32xf32>, vector<8x32xf32> -> vector<8x32xf32>
    %cst_3 = arith.constant dense<0.000000e+00> : vector<32xf32>
    %3 = vector.multi_reduction <add>, %2, %cst_3 [0] : vector<8x32xf32> to vector<32xf32>
    %4 = vector.shape_cast %3 : vector<32xf32> to vector<1x32xf32>
    %cst_4 = arith.constant 8.000000e+00 : f32
    %5 = vector.broadcast %cst_4 : f32 to vector<1x32xf32>
    %6 = arith.divf %4, %5 : vector<1x32xf32>
    %7 = vector.broadcast %6 : vector<1x32xf32> to vector<8x32xf32>
    %8 = arith.subf %2, %7 : vector<8x32xf32>
    %9 = arith.mulf %8, %8 : vector<8x32xf32>
    %cst_5 = arith.constant dense<0.000000e+00> : vector<32xf32>
    %10 = vector.multi_reduction <add>, %9, %cst_5 [0] : vector<8x32xf32> to vector<32xf32>
    %11 = vector.shape_cast %10 : vector<32xf32> to vector<1x32xf32>
    %cst_6 = arith.constant 8.000000e+00 : f32
    %12 = vector.broadcast %cst_6 : f32 to vector<1x32xf32>
    %13 = arith.divf %11, %12 : vector<1x32xf32>
    %c0_7 = arith.constant 0 : index
    %c0_8 = arith.constant 0 : index
    %14 = vector.load %arg2[%c0_7, %c0_8] : memref<1x32xf32, #tpu.memory_space<vmem>>, vector<1x32xf32>
    %cst_9 = arith.constant 9.99999974E-6 : f32
    %15 = vector.broadcast %cst_9 : f32 to vector<1x32xf32>
    %16 = arith.addf %13, %15 : vector<1x32xf32>
    %17 = math.rsqrt %16 : vector<1x32xf32>
    %18 = arith.mulf %14, %17 : vector<1x32xf32>
    %19 = vector.broadcast %18 : vector<1x32xf32> to vector<8x32xf32>
    %20 = arith.mulf %8, %19 : vector<8x32xf32>
    %c0_10 = arith.constant 0 : index
    %c0_11 = arith.constant 0 : index
    %21 = vector.load %arg3[%c0_10, %c0_11] : memref<1x32xf32, #tpu.memory_space<vmem>>, vector<1x32xf32>
    %22 = vector.broadcast %21 : vector<1x32xf32> to vector<8x32xf32>
    %23 = arith.addf %20, %22 : vector<8x32xf32>
    %cst_12 = arith.constant 0.000000e+00 : f32
    %24 = vector.broadcast %cst_12 : f32 to vector<8x32xf32>
    %25 = arith.maximumf %23, %24 : vector<8x32xf32>
    %c0_13 = arith.constant 0 : index
    %c0_14 = arith.constant 0 : index
    %26 = vector.load %arg4[%c0_13, %c0_14] : memref<32x128xf32, #tpu.memory_space<vmem>>, vector<32x128xf32>
    %cst_15 = arith.constant dense<0.000000e+00> : vector<8x128xf32>
    %27 = tpu.matmul %25, %26, %cst_15 {dimension_numbers = #tpu.dot_dimension_numbers<[1], [0], [0], [1], [0, 0, 1, 1], [], []>} : vector<8x32xf32>, vector<32x128xf32>, vector<8x128xf32> -> vector<8x128xf32>
    %c0_16 = arith.constant 0 : index
    %c0_17 = arith.constant 0 : index
    %28 = vector.load %arg5[%c0_16, %c0_17] : memref<1x128xf32, #tpu.memory_space<vmem>>, vector<1x128xf32>
    %29 = vector.broadcast %28 : vector<1x128xf32> to vector<8x128xf32>
    %30 = arith.addf %27, %29 : vector<8x128xf32>
    %c0_18 = arith.constant 0 : index
    %c0_19 = arith.constant 0 : index
    %31 = vector.load %arg6[%c0_18, %c0_19] : memref<8x128xf32, #tpu.memory_space<vmem>>, vector<8x128xf32>
    tpu.vector_store %arg6[%c0_18, %c0_19], %30 {strides = array<i32>} : memref<8x128xf32, #tpu.memory_space<vmem>>, vector<8x128xf32>,
    return
  }
}

</mosaic_0001>

<llo_original>
// kernel: tpu_custom_call.1
$region0: #{tpu_custom_call.1}
  #allocation0 [shape = 'u32[]', space=smem, size = 0x4, offset = 0x4, fixed_abs, tag = 'smem constant byte address 0x4 - core index']
  #allocation1 [shape = 'u32[144,128]{1,0:T(1,128)}', space=vmem, size = 0x12000, scoped, tag = 'internal scratch']
  %s0 = inlined_call_operand.hbm [shape: f32[8,32], index: 0, kind: input, shape index: {}]
  %s1 = inlined_call_operand.hbm [shape: f32[32,32], index: 1, kind: input, shape index: {}]
  %s2 = inlined_call_operand.vmem [shape: f32[1,32], index: 2, kind: input, shape index: {}]
  %s3 = inlined_call_operand.vmem [shape: f32[1,32], index: 3, kind: input, shape index: {}]
  %s4 = inlined_call_operand.hbm [shape: f32[32,128], index: 4, kind: input, shape index: {}]
  %s5 = inlined_call_operand.vmem [shape: f32[1,128], index: 5, kind: input, shape index: {}]
  %s6 = inlined_call_operand.hbm [shape: f32[8,128], index: 6, kind: output, shape index: {}]
  %s7 = sld [smem:[#allocation0]]
  $region46: #{tpu_custom_call.1} parent=0
    _
  %s9 = ssub.s32 1, %s7
  %s10 = scalar_select 0, %s9, %s7
  $region1: #{tpu_custom_call.1} parent=0
    #allocation2 [shape = 'u8[4096]{0}', space=vmem, size = 0x1000, scoped, tag = 'input window, operand 0, single buffered']
    #allocation3 [shape = 's32[1]{0}', space=sflag, size = 0x4, scoped, tag = 'scoped memory for tpu_custom_call.1']
    #allocation4 [shape = 's32[1]{0}', space=sflag, size = 0x4, scoped, tag = 'scoped memory for tpu_custom_call.1']
    #allocation5 [shape = 'u8[16384]{0}', space=vmem, size = 0x4000, scoped, tag = 'input window, operand 1, single buffered']
    #allocation6 [shape = 's32[1]{0}', space=sflag, size = 0x4, scoped, tag = 'scoped memory for tpu_custom_call.1']
    #allocation7 [shape = 'u8[16384]{0}', space=vmem, size = 0x4000, scoped, tag = 'input window, operand 4, single buffered']
    #allocation8 [shape = 'u8[4096]{0}', space=vmem, size = 0x1000, scoped, tag = 'output window, operand 0, single buffered']
    %11 = vsyncpa [#allocation3], 0
    %12 = vsyncpa [#allocation6], 0
    %13 = vsyncpa [#allocation4], 0
    // Predicated region
    $region2: #{tpu_custom_call.1} parent=1 // pred_check
      _
    $region3: #{tpu_custom_call.1} parent=1 // pred_check_branch
      %15 = sbr.rel (0) target = $region5
    $region4: #{tpu_custom_call.1} parent=1 // pred_region
      %s17 = ssub.s32 128, 128
      %18 = vsyncadd [#allocation3], %s17
      %s20 = sshll.u32 [#allocation2], 4
      %s21 = int_to_ptr.vmem [resolvable:$true] %s20
      %23 = dma.hbm_to_vmem [thread:$0]  %s0, 128, %s21, [#allocation3]
    $region5: #{tpu_custom_call.1} parent=1 // pred_fallthru
      _
    // Predicated region
    $region6: #{tpu_custom_call.1} parent=1 // pred_check
      _
    $region7: #{tpu_custom_call.1} parent=1 // pred_check_branch
      %25 = sbr.rel (0) target = $region9
    $region8: #{tpu_custom_call.1} parent=1 // pred_region
      %s27 = ssub.s32 512, 512
      %28 = vsyncadd [#allocation6], %s27
      %s29 = sshll.u32 [#allocation5], 4
      %s30 = int_to_ptr.vmem [resolvable:$true] %s29
      %35 = dma.hbm_to_vmem [thread:$0]  %s1, 512, %s30, [#allocation6], 128, 128, 8
    $region9: #{tpu_custom_call.1} parent=1 // pred_fallthru
      _
    // Predicated region
    $region10: #{tpu_custom_call.1} parent=1 // pred_check
      _
    $region11: #{tpu_custom_call.1} parent=1 // pred_check_branch
      %37 = sbr.rel (0) target = $region13
    $region12: #{tpu_custom_call.1} parent=1 // pred_region
      _
    $region13: #{tpu_custom_call.1} parent=1 // pred_fallthru
      _
    // Predicated region
    $region14: #{tpu_custom_call.1} parent=1 // pred_check
      _
    $region15: #{tpu_custom_call.1} parent=1 // pred_check_branch
      %39 = sbr.rel (0) target = $region17
    $region16: #{tpu_custom_call.1} parent=1 // pred_region
      _
    $region17: #{tpu_custom_call.1} parent=1 // pred_fallthru
      _
    // Predicated region
    $region18: #{tpu_custom_call.1} parent=1 // pred_check
      _
    $region19: #{tpu_custom_call.1} parent=1 // pred_check_branch
      %41 = sbr.rel (0) target = $region21
    $region20: #{tpu_custom_call.1} parent=1 // pred_region
      %s43 = ssub.s32 512, 512
      %44 = vsyncadd [#allocation6], %s43
      %s45 = sshll.u32 [#allocation7], 4
      %s46 = int_to_ptr.vmem [resolvable:$true] %s45
      %51 = dma.hbm_to_vmem [thread:$0]  %s4, 512, %s46, [#allocation6], 128, 128, 8
    $region21: #{tpu_custom_call.1} parent=1 // pred_fallthru
      _
    // Predicated region
    $region22: #{tpu_custom_call.1} parent=1 // pred_check
      _
    $region23: #{tpu_custom_call.1} parent=1 // pred_check_branch
      %53 = sbr.rel (0) target = $region25
    $region24: #{tpu_custom_call.1} parent=1 // pred_region
      _
    $region25: #{tpu_custom_call.1} parent=1 // pred_fallthru
      _
    // Predicated region
    $region26: #{tpu_custom_call.1} parent=1 // pred_check
      _
    $region27: #{tpu_custom_call.1} parent=1 // pred_check_branch
      %55 = sbr.rel (0) target = $region29
    $region28: #{tpu_custom_call.1} parent=1 // pred_region
      %56 = dma.done [#allocation3], 128
    $region29: #{tpu_custom_call.1} parent=1 // pred_fallthru
      _
    // Predicated region
    $region30: #{tpu_custom_call.1} parent=1 // pred_check
      _
    $region31: #{tpu_custom_call.1} parent=1 // pred_check_branch
      %58 = sbr.rel (0) target = $region33
    $region32: #{tpu_custom_call.1} parent=1 // pred_region
      %59 = dma.done [#allocation6], 512
    $region33: #{tpu_custom_call.1} parent=1 // pred_fallthru
      _
    // Predicated region
    $region34: #{tpu_custom_call.1} parent=1 // pred_check
      _
    $region35: #{tpu_custom_call.1} parent=1 // pred_check_branch
      %61 = sbr.rel (0) target = $region37
    $region36: #{tpu_custom_call.1} parent=1 // pred_region
      %62 = dma.done [#allocation6], 512
    $region37: #{tpu_custom_call.1} parent=1 // pred_fallthru
      _
    %v63 = vld [vmem:[#allocation2] sm:$0xff]
    %v64 = vld [vmem:[#allocation5] sm:$0xff]
    %v65 = vld [vmem:[#allocation5 + $0x8] sm:$0xff]
    %v66 = vld [vmem:[#allocation5 + $0x10] sm:$0xff]
    %v67 = vld [vmem:[#allocation5 + $0x18] sm:$0xff]
    %vm68 = vcmask 261120
    %v70 = vsel %vm68, %v63, 0
    %72 = vmatprep.subr.mxu0 0.0
    %73 = vmatpush1.msra.mxu0 %v64
    %74 = vmatprep.subr.mxu0 0.0
    %75 = vmatpush1.msra.mxu0 %v65
    %76 = vmatprep.subr.mxu0 0.0
    %77 = vmatpush1.msra.mxu0 %v66
    %78 = vmatprep.subr.mxu0 0.0
    %79 = vmatpush1.msra.mxu0 %v67
    %80 = vmatprep.subr.mxu0 0.0
    %81 = vmatpush1.msra.mxu0 0.0
    %82 = vmatprep.subr.mxu0 0.0
    %83 = vmatpush1.msra.mxu0 0.0
    %84 = vmatprep.subr.mxu0 0.0
    %85 = vmatpush1.msra.mxu0 0.0
    %86 = vmatprep.subr.mxu0 0.0
    %87 = vmatpush1.msra.mxu0 0.0
    %88 = vmatprep.subr.mxu0 0.0
    %89 = vmatpush1.msra.mxu0 0.0
    %90 = vmatprep.subr.mxu0 0.0
    %91 = vmatpush1.msra.mxu0 0.0
    %92 = vmatprep.subr.mxu0 0.0
    %93 = vmatpush1.msra.mxu0 0.0
    %94 = vmatprep.subr.mxu0 0.0
    %95 = vmatpush1.msra.mxu0 0.0
    %96 = vmatprep.subr.mxu0 0.0
    %97 = vmatpush1.msra.mxu0 0.0
    %98 = vmatprep.subr.mxu0 0.0
    %99 = vmatpush1.msra.mxu0 0.0
    %100 = vmatprep.subr.mxu0 0.0
    %101 = vmatpush1.msra.mxu0 0.0
    %102 = vmatprep.subr.mxu0 0.0
    %103 = vmatpush1.msra.mxu0 0.0
    %104 = vmatprep.subr.mxu0 0.0
    %105 = vmatpush1.msra.mxu0 0.0
    %106 = vmatprep.subr.mxu0 0.0
    %107 = vmatpush1.msra.mxu0 0.0
    %108 = vmatprep.subr.mxu0 0.0
    %109 = vmatpush1.msra.mxu0 0.0
    %110 = vmatprep.subr.mxu0 0.0
    %111 = vmatpush1.msra.mxu0 0.0
    %112 = vmatprep.subr.mxu0 0.0
    %113 = vmatpush1.msra.mxu0 0.0
    %114 = vmatprep.subr.mxu0 0.0
    %115 = vmatpush1.msra.mxu0 0.0
    %116 = vmatprep.subr.mxu0 0.0
    %117 = vmatpush1.msra.mxu0 0.0
    %118 = vmatprep.subr.mxu0 0.0
    %119 = vmatpush1.msra.mxu0 0.0
    %120 = vmatprep.subr.mxu0 0.0
    %121 = vmatpush1.msra.mxu0 0.0
    %122 = vmatprep.subr.mxu0 0.0
    %123 = vmatpush1.msra.mxu0 0.0
    %124 = vmatprep.subr.mxu0 0.0
    %125 = vmatpush1.msra.mxu0 0.0
    %126 = vmatprep.subr.mxu0 0.0
    %127 = vmatpush1.msra.mxu0 0.0
    %128 = vmatprep.subr.mxu0 0.0
    %129 = vmatpush1.msra.mxu0 0.0
    %130 = vmatprep.subr.mxu0 0.0
    %131 = vmatpush1.msra.mxu0 0.0
    %132 = vmatprep.subr.mxu0 0.0
    %133 = vmatpush1.msra.mxu0 0.0
    %134 = vmatprep.subr.mxu0 0.0
    %135 = vmatpush1.msra.mxu0 0.0
    %136 = vmatprep.mubr.f32.mxu0 0.0
    %137 = vmatmul.mubr.f32.gmra.mrb[0].mxu0 %v70
    %v138 = vpop.f32.mrb[0].mxu0
    %v139 = vadd.f32 0.0, %v138
    %v140 = vpop.f32.mrb[0].mxu0
    %141 = vdwg.mxu0
    %v142 = vsel %vm68, %v139, 0.0
    %v143 = vrot.slane %v142, 4
    %v144 = vadd.f32 %v142, %v143
    %v145 = vrot.slane %v144, 2
    %v146 = vadd.f32 %v144, %v145
    %v147 = vrot.slane %v146, 1
    %v148 = vadd.f32 %v146, %v147
    %v149 = vrcp.pop 8.0
    %v150 = vmul.f32 %v148, %v149
    %v151 = vsub.f32 %v139, %v150
    %v152 = vmul.f32 %v151, %v151
    %v153 = vsel %vm68, %v152, 0.0
    %v154 = vrot.slane %v153, 4
    %v155 = vadd.f32 %v153, %v154
    %v156 = vrot.slane %v155, 2
    %v157 = vadd.f32 %v155, %v156
    %v158 = vrot.slane %v157, 1
    %v159 = vadd.f32 %v157, %v158
    %v160 = vmul.f32 %v159, %v149
    %v161 = vld [vmem:[%s2] sm:$0x1]
    %v162 = vadd.f32 %v160, 1e-05
    %v163 = vrsqrt.pop %v162
    %v164 = vmul.f32 %v161, %v163
    %v166 = vlaneseq
    %v167 = vshrl.u32 %v166, 7
    %v168 = vsub.s32 0, %v167
    %v169 = vrot.slane %v164, %v168
    %v171 = vmul.f32 %v151, %v169
    %v172 = vld [vmem:[%s3] sm:$0x1]
    %v174 = vlaneseq
    %v175 = vshrl.u32 %v174, 7
    %v176 = vsub.s32 0, %v175
    %v177 = vrot.slane %v172, %v176
    %v179 = vadd.f32 %v171, %v177
    %v180 = vmax.f32 %v179, 0.0
    %v181 = vld [vmem:[#allocation7] sm:$0xff]
    %v182 = vld [vmem:[#allocation7 + $0x8] sm:$0xff]
    %v183 = vld [vmem:[#allocation7 + $0x10] sm:$0xff]
    %v184 = vld [vmem:[#allocation7 + $0x18] sm:$0xff]
    %v185 = vld [vmem:[%s5] sm:$0x1]
    %v187 = vlaneseq
    %v188 = vshrl.u32 %v187, 7
    %v189 = vsub.s32 0, %v188
    %v190 = vrot.slane %v185, %v189
    %v193 = vsel %vm68, %v180, 0
    %195 = vmatprep.subr.mxu0 0.0
    %196 = vmatpush1.msra.mxu0 %v181
    %197 = vmatprep.subr.mxu0 0.0
    %198 = vmatpush1.msra.mxu0 %v182
    %199 = vmatprep.subr.mxu0 0.0
    %200 = vmatpush1.msra.mxu0 %v183
    %201 = vmatprep.subr.mxu0 0.0
    %202 = vmatpush1.msra.mxu0 %v184
    %203 = vmatprep.subr.mxu0 0.0
    %204 = vmatpush1.msra.mxu0 0.0
    %205 = vmatprep.subr.mxu0 0.0
    %206 = vmatpush1.msra.mxu0 0.0
    %207 = vmatprep.subr.mxu0 0.0
    %208 = vmatpush1.msra.mxu0 0.0
    %209 = vmatprep.subr.mxu0 0.0
    %210 = vmatpush1.msra.mxu0 0.0
    %211 = vmatprep.subr.mxu0 0.0
    %212 = vmatpush1.msra.mxu0 0.0
    %213 = vmatprep.subr.mxu0 0.0
    %214 = vmatpush1.msra.mxu0 0.0
    %215 = vmatprep.subr.mxu0 0.0
    %216 = vmatpush1.msra.mxu0 0.0
    %217 = vmatprep.subr.mxu0 0.0
    %218 = vmatpush1.msra.mxu0 0.0
    %219 = vmatprep.subr.mxu0 0.0
    %220 = vmatpush1.msra.mxu0 0.0
    %221 = vmatprep.subr.mxu0 0.0
    %222 = vmatpush1.msra.mxu0 0.0
    %223 = vmatprep.subr.mxu0 0.0
    %224 = vmatpush1.msra.mxu0 0.0
    %225 = vmatprep.subr.mxu0 0.0
    %226 = vmatpush1.msra.mxu0 0.0
    %227 = vmatprep.subr.mxu0 0.0
    %228 = vmatpush1.msra.mxu0 0.0
    %229 = vmatprep.subr.mxu0 0.0
    %230 = vmatpush1.msra.mxu0 0.0
    %231 = vmatprep.subr.mxu0 0.0
    %232 = vmatpush1.msra.mxu0 0.0
    %233 = vmatprep.subr.mxu0 0.0
    %234 = vmatpush1.msra.mxu0 0.0
    %235 = vmatprep.subr.mxu0 0.0
    %236 = vmatpush1.msra.mxu0 0.0
    %237 = vmatprep.subr.mxu0 0.0
    %238 = vmatpush1.msra.mxu0 0.0
    %239 = vmatprep.subr.mxu0 0.0
    %240 = vmatpush1.msra.mxu0 0.0
    %241 = vmatprep.subr.mxu0 0.0
    %242 = vmatpush1.msra.mxu0 0.0
    %243 = vmatprep.subr.mxu0 0.0
    %244 = vmatpush1.msra.mxu0 0.0
    %245 = vmatprep.subr.mxu0 0.0
    %246 = vmatpush1.msra.mxu0 0.0
    %247 = vmatprep.subr.mxu0 0.0
    %248 = vmatpush1.msra.mxu0 0.0
    %249 = vmatprep.subr.mxu0 0.0
    %250 = vmatpush1.msra.mxu0 0.0
    %251 = vmatprep.subr.mxu0 0.0
    %252 = vmatpush1.msra.mxu0 0.0
    %253 = vmatprep.subr.mxu0 0.0
    %254 = vmatpush1.msra.mxu0 0.0
    %255 = vmatprep.subr.mxu0 0.0
    %256 = vmatpush1.msra.mxu0 0.0
    %257 = vmatprep.subr.mxu0 0.0
    %258 = vmatpush1.msra.mxu0 0.0
    %259 = vmatprep.mubr.f32.mxu0 0.0
    %260 = vmatmul.mubr.f32.gmra.mrb[0].mxu0 %v193
    %v261 = vpop.f32.mrb[0].mxu0
    %v262 = vadd.f32 %v190, %v261
    %v263 = vpop.f32.mrb[0].mxu0
    %264 = vdwg.mxu0
    %265 = vst [vmem:[#allocation8] sm:$0xff] %v262
    // Predicated region
    $region38: #{tpu_custom_call.1} parent=1 // pred_check
      _
    $region39: #{tpu_custom_call.1} parent=1 // pred_check_branch
      %267 = sbr.rel (0) target = $region41
    $region40: #{tpu_custom_call.1} parent=1 // pred_region
      %s269 = ssub.s32 128, 128
      %270 = vsyncadd [#allocation4], %s269
      %s272 = sshll.u32 [#allocation8], 4
      %s273 = int_to_ptr.vmem [resolvable:$true] %s272
      %275 = dma.vmem_to_hbm [thread:$0]  %s273, 128, %s6, [#allocation4]
    $region41: #{tpu_custom_call.1} parent=1 // pred_fallthru
      _
    // Predicated region
    $region42: #{tpu_custom_call.1} parent=1 // pred_check
      _
    $region43: #{tpu_custom_call.1} parent=1 // pred_check_branch
      %277 = sbr.rel (0) target = $region45
    $region44: #{tpu_custom_call.1} parent=1 // pred_region
      %278 = dma.done [#allocation4], 128
    $region45: #{tpu_custom_call.1} parent=1 // pred_fallthru
      _
    %279 = vsyncpa [#allocation3], 1
    %280 = vsyncpa [#allocation6], 1
    %281 = vsyncpa [#allocation4], 1

</llo_original>
